<compile_context>
chip_gen: v5e
topology: v5e:2x2
jax: 0.10.0
libtpu: 0.0.40
codegen_flags: <defaults>
</compile_context>

<pallas_src>
import math

import jax
import jax.numpy as jnp
from jax.experimental import pallas as pl
from jax.experimental.pallas import tpu as pltpu


# ---------------------------------------------------------------------------
# Kernel
# ---------------------------------------------------------------------------
def _make_fr_kernel(pre_win):
    def kernel(x_ref, w_ref, b_ref, o_ref):
        # x_ref: (BT, TY, p_len)      -- native x layout, p_len on lanes
        # w_ref: (pre_win, TY, p_len)
        # b_ref: (pre_win, 1, TY)
        # o_ref: (BT, pre_win, TY)    -- y_dim block lane-dense (last dim)
        x = x_ref[...].astype(jnp.float32)                  # upcast once per tile
        for p in range(pre_win):                            # pre_win in {1..3}: static unroll
            w_p = w_ref[p].astype(jnp.float32)              # (TY, p_len)
            acc = jnp.sum(x * w_p[None, :, :], axis=-1)     # (BT, TY), f32 VPU mul + reduce
            b_p = b_ref[p].astype(jnp.float32)              # (1, TY)
            o_ref[:, p, :] = (acc + b_p).astype(o_ref.dtype)
    return kernel


# ---------------------------------------------------------------------------
# Tile selection
# ---------------------------------------------------------------------------
_LANE = 128
_MAX_TY = 512
_MAX_BT = 256
_WORKING_SET_BUDGET = 8 * 1024 * 1024     # double-buffered blocks (conservative)
_VMEM_LIMIT = 32 * 1024 * 1024            # safe on v5e/v6e/v7x


def _largest_divisor_leq(n, cap):
    d = max(1, min(n, cap))
    while n % d != 0:
        d -= 1
    return d


def _pick_ty(y_dim):
    if y_dim % _LANE == 0:
        t = min(_MAX_TY, y_dim)
        t -= t % _LANE
        while y_dim % t != 0:
            t -= _LANE
        return t
    # Not lane-alignable without padding: use the full axis (legal full-dim block).
    # TODO(synk): pad y_dim to a multiple of 128 for very large, unaligned y_dim.
    return y_dim


def _choose_tiles(batch, y_dim, p_len, pre_win, itemsize):
    ty = _pick_ty(y_dim)

    def working_set(bt_, ty_):
        x_b = bt_ * ty_ * p_len
        w_b = pre_win * ty_ * p_len
        b_b = pre_win * ty_
        o_b = bt_ * pre_win * ty_
        return 2 * itemsize * (x_b + w_b + b_b + o_b)       # double-buffered

    bt = _largest_divisor_leq(batch, _MAX_BT)
    while bt > 1 and working_set(bt, ty) > _WORKING_SET_BUDGET:
        bt = _largest_divisor_leq(batch, bt - 1)
    while (ty > _LANE and y_dim % _LANE == 0
           and working_set(bt, ty) > _WORKING_SET_BUDGET):
        ty -= _LANE
        while y_dim % ty != 0:
            ty -= _LANE
    return bt, ty


# ---------------------------------------------------------------------------
# Forward wrapper
# ---------------------------------------------------------------------------
def fr_model_forward(x, weight, bias, *, pre_win):
    """x: (batch, y_dim, p_len); weight: (y_dim, p_len, pre_win); bias: (y_dim, pre_win)."""
    batch, y_dim, p_len = x.shape
    assert weight.shape == (y_dim, p_len, pre_win)
    assert bias.shape == (y_dim, pre_win)

    # Rearrange only the small parameters; x keeps its native layout (no extra
    # HBM pass over the activation tensor).
    w_k = jnp.transpose(weight, (2, 0, 1))            # (pre_win, y_dim, p_len)
    b_k = jnp.transpose(bias, (1, 0))[:, None, :]     # (pre_win, 1, y_dim)

    itemsize = max(jnp.dtype(x.dtype).itemsize, 4)    # f32 accumulation temps
    bt, ty = _choose_tiles(batch, y_dim, p_len, pre_win, itemsize)
    n_b = batch // bt
    n_y = y_dim // ty

    out = pl.pallas_call(
        _make_fr_kernel(pre_win),
        out_shape=jax.ShapeDtypeStruct((batch, pre_win, y_dim), x.dtype),
        grid_spec=pltpu.PrefetchScalarGridSpec(
            num_scalar_prefetch=0,
            grid=(n_y, n_b),                           # weight block held across batch blocks
            in_specs=[
                pl.BlockSpec((bt, ty, p_len), lambda yi, bi: (bi, yi, 0)),
                pl.BlockSpec((pre_win, ty, p_len), lambda yi, bi: (0, yi, 0)),
                pl.BlockSpec((pre_win, 1, ty), lambda yi, bi: (0, 0, yi)),
            ],
            out_specs=pl.BlockSpec((bt, pre_win, ty), lambda yi, bi: (bi, 0, yi)),
        ),
        compiler_params=pltpu.CompilerParams(
            dimension_semantics=("parallel", "parallel"),
            vmem_limit_bytes=_VMEM_LIMIT,
        ),
    )(x, w_k, b_k)                                     # (batch, pre_win, y_dim)

    if pre_win == 1:
        return out[:, 0, :]                            # free squeeze, layout unchanged
    return out                                         # already in PyTorch output layout


# ---------------------------------------------------------------------------
# Params / reference
# ---------------------------------------------------------------------------
def init_params(key, y_dim, p_len, pre_win, dtype=jnp.float32):
    """Matches PyTorch __init__: kaiming_uniform_(fan_in=p_len*pre_win, relu gain); bias left as ones."""
    fan_in = p_len * pre_win
    bound = math.sqrt(2.0) * math.sqrt(3.0 / fan_in)
    weight = jax.random.uniform(
        key, (y_dim, p_len, pre_win), dtype=dtype, minval=-bound, maxval=bound
    )
    bias = jnp.ones((y_dim, pre_win), dtype=dtype)
    return weight, bias


def _reference(x, weight, bias, pre_win):
    out = jnp.einsum("bjk,jkp->bpj", x, weight,
                     precision=jax.lax.Precision.HIGHEST)
    out = out + jnp.transpose(bias, (1, 0))[None, :, :]   # (batch, pre_win, y_dim)
    if pre_win == 1:
        return out[:, 0, :]
    return out


# ---------------------------------------------------------------------------
# Self-test
# ---------------------------------------------------------------------------
if __name__ == "__main__":
    key = jax.random.PRNGKey(0)
    k_x, k_w = jax.random.split(key)

    cases = [
        # (batch, y_dim, p_len, pre_win)
        (2, 4, 32, 1),       # tiny / unaligned: full-dim blocks
        (2, 4, 32, 3),
        (4, 256, 32, 2),     # lane-aligned channel block
        (8, 1024, 64, 3),    # blocked grid over y_dim (2 channel blocks)
    ]

    ok = True
    for batch, y_dim, p_len, pre_win in cases:
        weight, bias = init_params(k_w, y_dim, p_len, pre_win)
        x = jax.random.normal(k_x, (batch, y_dim, p_len), dtype=jnp.float32)

        out = fr_model_forward(x, weight, bias, pre_win=pre_win)
        out = jax.block_until_ready(out)

        ref = _reference(x, weight, bias, pre_win)
        expect_shape = (batch, y_dim) if pre_win == 1 else (batch, pre_win, y_dim)
        if out.shape != expect_shape:
            ok = False
        if not jnp.allclose(out, ref, atol=1e-4, rtol=1e-4):
            ok = False

    if ok:
        print("KERNEL_OK")
</pallas_src>

<mosaic_0001>
module attributes {stable_mosaic.version = 11 : i64} {
  func.func @kernel(%arg0: i32, %arg1: i32, %arg2: memref<2x4x32xf32, #tpu.memory_space<vmem>>, %arg3: memref<1x4x32xf32, #tpu.memory_space<vmem>>, %arg4: memref<1x1x4xf32, #tpu.memory_space<vmem>>, %arg5: memref<2x1x4xf32, #tpu.memory_space<vmem>>) attributes {dimension_semantics = [#tpu.dimension_semantics<parallel>, #tpu.dimension_semantics<parallel>], iteration_bounds = array<i64: 1, 1>, scalar_prefetch = 0 : i64, scratch_operands = 0 : i64, tpu.core_type = #tpu.core_type<tc>, window_params = [{transform_indices = @transform_0, window_bounds = array<i64: 2, 4, 32>}, {transform_indices = @transform_1, window_bounds = array<i64: 1, 4, 32>}, {transform_indices = @transform_2, window_bounds = array<i64: 1, 1, 4>}, {transform_indices = @transform_3, window_bounds = array<i64: 2, 1, 4>}]} {
    %c0 = arith.constant 0 : index
    %c0_0 = arith.constant 0 : index
    %c0_1 = arith.constant 0 : index
    %0 = vector.load %arg2[%c0, %c0_0, %c0_1] : memref<2x4x32xf32, #tpu.memory_space<vmem>>, vector<2x4x32xf32>
    %c0_2 = arith.constant 0 : index
    %c0_3 = arith.constant 0 : index
    %c0_4 = arith.constant 0 : index
    %1 = vector.load %arg3[%c0_2, %c0_3, %c0_4] : memref<1x4x32xf32, #tpu.memory_space<vmem>>, vector<1x4x32xf32>
    %2 = vector.shape_cast %1 : vector<1x4x32xf32> to vector<4x32xf32>
    %3 = vector.shape_cast %2 : vector<4x32xf32> to vector<1x4x32xf32>
    %4 = vector.broadcast %3 : vector<1x4x32xf32> to vector<2x4x32xf32>
    %5 = arith.mulf %0, %4 : vector<2x4x32xf32>
    %cst = arith.constant dense<0.000000e+00> : vector<2x4xf32>
    %6 = vector.multi_reduction <add>, %5, %cst [2] : vector<2x4x32xf32> to vector<2x4xf32>
    %c0_5 = arith.constant 0 : index
    %c0_6 = arith.constant 0 : index
    %c0_7 = arith.constant 0 : index
    %7 = vector.load %arg4[%c0_5, %c0_6, %c0_7] : memref<1x1x4xf32, #tpu.memory_space<vmem>>, vector<1x1x4xf32>
    %8 = vector.shape_cast %7 : vector<1x1x4xf32> to vector<1x4xf32>
    %9 = vector.broadcast %8 : vector<1x4xf32> to vector<2x4xf32>
    %10 = arith.addf %6, %9 : vector<2x4xf32>
    %c0_8 = arith.constant 0 : index
    %c0_9 = arith.constant 0 : index
    %c0_10 = arith.constant 0 : index
    %11 = vector.load %arg5[%c0_8, %c0_9, %c0_10] : memref<2x1x4xf32, #tpu.memory_space<vmem>>, vector<2x1x4xf32>
    %12 = vector.shape_cast %11 : vector<2x1x4xf32> to vector<2x4xf32>
    %13 = vector.shape_cast %10 : vector<2x4xf32> to vector<2x1x4xf32>
    tpu.vector_store %arg5[%c0_8, %c0_9, %c0_10], %13 {strides = array<i32>} : memref<2x1x4xf32, #tpu.memory_space<vmem>>, vector<2x1x4xf32>,
    return
  }
  func.func @transform_0(%arg0: i32, %arg1: i32) -> (i32, i32, i32) {
    %c0_i32 = arith.constant 0 : i32
    %c0_i32_0 = arith.constant 0 : i32
    return %arg1, %arg0, %c0_i32 : i32, i32, i32
  }
  func.func @transform_1(%arg0: i32, %arg1: i32) -> (i32, i32, i32) {
    %c0_i32 = arith.constant 0 : i32
    %c0_i32_0 = arith.constant 0 : i32
    %c0_i32_1 = arith.constant 0 : i32
    return %c0_i32, %arg0, %c0_i32_0 : i32, i32, i32
  }
  func.func @transform_2(%arg0: i32, %arg1: i32) -> (i32, i32, i32) {
    %c0_i32 = arith.constant 0 : i32
    %c0_i32_0 = arith.constant 0 : i32
    %c0_i32_1 = arith.constant 0 : i32
    return %c0_i32, %c0_i32_0, %arg0 : i32, i32, i32
  }
  func.func @transform_3(%arg0: i32, %arg1: i32) -> (i32, i32, i32) {
    %c0_i32 = arith.constant 0 : i32
    %c0_i32_0 = arith.constant 0 : i32
    return %arg1, %c0_i32, %arg0 : i32, i32, i32
  }
}

</mosaic_0001>

<llo_original>
// kernel: tpu_custom_call.1
$region0: #{tpu_custom_call.1}
  #allocation0 [shape = 'u32[]', space=smem, size = 0x4, offset = 0x4, fixed_abs, tag = 'smem constant byte address 0x4 - core index']
  #allocation1 [shape = 'u32[72,128]{1,0:T(1,128)}', space=vmem, size = 0x9000, scoped, tag = 'internal scratch']
  %s0 = inlined_call_operand.hbm [shape: f32[2,4,32], index: 0, kind: input, shape index: {}]
  %s1 = inlined_call_operand.hbm [shape: f32[1,4,32], index: 1, kind: input, shape index: {}]
  %s2 = inlined_call_operand.vmem [shape: f32[1,1,4], index: 2, kind: input, shape index: {}]
  %s3 = inlined_call_operand.hbm [shape: f32[2,1,4], index: 3, kind: output, shape index: {}]
  %s4 = sld [smem:[#allocation0]]
  $region30: #{tpu_custom_call.1} parent=0
    _
  %s6 = ssub.s32 1, %s4
  %s7 = scalar_select 0, %s6, %s4
  $region1: #{tpu_custom_call.1} parent=0
    #allocation2 [shape = 'u8[4096]{0}', space=vmem, size = 0x1000, scoped, tag = 'input window, operand 0, single buffered']
    #allocation3 [shape = 's32[1]{0}', space=sflag, size = 0x4, scoped, tag = 'scoped memory for tpu_custom_call.1']
    #allocation4 [shape = 's32[1]{0}', space=sflag, size = 0x4, scoped, tag = 'scoped memory for tpu_custom_call.1']
    #allocation5 [shape = 'u8[2048]{0}', space=vmem, size = 0x800, scoped, tag = 'input window, operand 1, single buffered']
    #allocation6 [shape = 's32[1]{0}', space=sflag, size = 0x4, scoped, tag = 'scoped memory for tpu_custom_call.1']
    #allocation7 [shape = 'u8[1024]{0}', space=vmem, size = 0x400, scoped, tag = 'output window, operand 0, single buffered']
    %8 = vsyncpa [#allocation3], 0
    %9 = vsyncpa [#allocation6], 0
    %10 = vsyncpa [#allocation4], 0
    // Predicated region
    $region2: #{tpu_custom_call.1} parent=1 // pred_check
      _
    $region3: #{tpu_custom_call.1} parent=1 // pred_check_branch
      %12 = sbr.rel (0) target = $region5
    $region4: #{tpu_custom_call.1} parent=1 // pred_region
      %14 = vsyncadd [#allocation3], 0
      %s15 = sshll.u32 %s0, 4
      %s16 = int_to_ptr.hbm [resolvable:$true] %s15
      %s17 = sshll.u32 [#allocation2], 4
      %s18 = int_to_ptr.vmem [resolvable:$true] %s17
      %23 = dma.hbm_to_vmem [thread:$0]  %s16, 128, %s18, [#allocation3], 64, 64, 4
    $region5: #{tpu_custom_call.1} parent=1 // pred_fallthru
      _
    // Predicated region
    $region6: #{tpu_custom_call.1} parent=1 // pred_check
      _
    $region7: #{tpu_custom_call.1} parent=1 // pred_check_branch
      %25 = sbr.rel (0) target = $region9
    $region8: #{tpu_custom_call.1} parent=1 // pred_region
      %27 = vsyncadd [#allocation6], 0
      %s29 = sshll.u32 %s1, 4
      %s30 = int_to_ptr.hbm [resolvable:$true] %s29
      %s31 = sshll.u32 [#allocation5], 4
      %s32 = int_to_ptr.vmem [resolvable:$true] %s31
      %34 = dma.hbm_to_vmem [thread:$0]  %s30, 64, %s32, [#allocation6]
    $region9: #{tpu_custom_call.1} parent=1 // pred_fallthru
      _
    // Predicated region
    $region10: #{tpu_custom_call.1} parent=1 // pred_check
      _
    $region11: #{tpu_custom_call.1} parent=1 // pred_check_branch
      %36 = sbr.rel (0) target = $region13
    $region12: #{tpu_custom_call.1} parent=1 // pred_region
      _
    $region13: #{tpu_custom_call.1} parent=1 // pred_fallthru
      _
    // Predicated region
    $region14: #{tpu_custom_call.1} parent=1 // pred_check
      _
    $region15: #{tpu_custom_call.1} parent=1 // pred_check_branch
      %38 = sbr.rel (0) target = $region17
    $region16: #{tpu_custom_call.1} parent=1 // pred_region
      %40 = dma.done [#allocation3], 128
    $region17: #{tpu_custom_call.1} parent=1 // pred_fallthru
      _
    // Predicated region
    $region18: #{tpu_custom_call.1} parent=1 // pred_check
      _
    $region19: #{tpu_custom_call.1} parent=1 // pred_check_branch
      %42 = sbr.rel (0) target = $region21
    $region20: #{tpu_custom_call.1} parent=1 // pred_region
      %44 = dma.done [#allocation6], 64
    $region21: #{tpu_custom_call.1} parent=1 // pred_fallthru
      _
    %v45 = vld [vmem:[#allocation2] sm:$0xf]
    %v46 = vld [vmem:[#allocation2 + $0x4] sm:$0xf]
    %v47 = vld [vmem:[#allocation5] sm:$0xf]
    %v48 = vmul.f32 %v45, %v47
    %v49 = vmul.f32 %v46, %v47
    %vm50 = vcmask 257024
    %v51 = vsel %vm50, %v48, 0.0
    %52 = vadd.xlane.f32.xlu0 %v51
    %v53 = vpop.xlane.xlu0 %52
    %v54 = vsel %vm50, %v49, 0.0
    %55 = vadd.xlane.f32.xlu0 %v54
    %v56 = vpop.xlane.xlu0 %55
    %v57 = vld [vmem:[%s2] sm:$0x1]
    %v59 = vperm.slane %v57, 0
    %v60 = vlaneseq
    %v61 = vshrl.u32 %v60, 7
    %63 = vset.pattern.permute.xlu0 %v61
    %64 = vperm.xlu0 %63, %v59
    %v65 = vpop.permute.xlu0 %64
    %v67 = vadd.f32 %v53, %v65
    %v68 = vadd.f32 %v56, %v65
    %71 = vset.pattern.permute.xlu0 0
    %72 = vperm.xlu0 %71, %v67
    %v73 = vpop.permute.xlu0 %72
    %74 = vset.pattern.permute.xlu0 0
    %75 = vperm.xlu0 %74, %v68
    %v76 = vpop.permute.xlu0 %75
    %v77 = vlaneseq
    %v78 = vand.u32 %v77, 127
    %v79 = vperm.slane %v73, %v78
    %v80 = vperm.slane %v76, %v78
    %vm83 = vcmask 24576
    %84 = vst.msk [vmem:[#allocation7] sm:$0x1] %vm83, %v79
    %85 = vst.msk [vmem:[#allocation7 + $0x1] sm:$0x1] %vm83, %v80
    // Predicated region
    $region22: #{tpu_custom_call.1} parent=1 // pred_check
      _
    $region23: #{tpu_custom_call.1} parent=1 // pred_check_branch
      %87 = sbr.rel (0) target = $region25
    $region24: #{tpu_custom_call.1} parent=1 // pred_region
      %89 = vsyncadd [#allocation4], 0
      %s90 = sshll.u32 [#allocation7], 4
      %s91 = int_to_ptr.vmem [resolvable:$true] %s90
      %s92 = sshll.u32 %s3, 4
      %s93 = int_to_ptr.hbm [resolvable:$true] %s92
      %98 = dma.vmem_to_hbm [thread:$0]  %s91, 32, %s93, [#allocation4], 16, 16, 1
    $region25: #{tpu_custom_call.1} parent=1 // pred_fallthru
      _
    // Predicated region
    $region26: #{tpu_custom_call.1} parent=1 // pred_check
      _
    $region27: #{tpu_custom_call.1} parent=1 // pred_check_branch
      %100 = sbr.rel (0) target = $region29
    $region28: #{tpu_custom_call.1} parent=1 // pred_region
      %102 = dma.done [#allocation4], 32
    $region29: #{tpu_custom_call.1} parent=1 // pred_fallthru
      _
    %103 = vsyncpa [#allocation3], 1
    %104 = vsyncpa [#allocation6], 1
    %105 = vsyncpa [#allocation4], 1

</llo_original>
